<compile_context>
chip_gen: v7x
topology: tpu7x:2x2x1
jax: 0.10.0
libtpu: 0.0.40
codegen_flags: <defaults>
</compile_context>

<pallas_src>
import jax
import jax.numpy as jnp
from jax.experimental import pallas as pl
from jax.experimental.pallas import tpu as pltpu

LANE = 128
SUBLANE = 8


def _round_up(x, m):
    return (x + m - 1) // m * m


def _mlp_kernel(x_ref, w1_ref, b1_ref, w2_ref, b2_ref, w3_ref, b3_ref, out_ref):
    # Cast obs to the MXU dtype *inside* the kernel (cheap VPU cast, no extra HBM pass).
    x = x_ref[...].astype(w1_ref.dtype)
    # Layer 1: MXU matmul with f32 accumulation; bias-add/ReLU on the VPU in f32.
    h = jnp.dot(x, w1_ref[...], preferred_element_type=jnp.float32)
    h = jnp.maximum(h + b1_ref[...], 0.0)
    # Layer 2 (astype is a trace-time no-op when the dtypes already match).
    h = jnp.dot(h.astype(w2_ref.dtype), w2_ref[...], preferred_element_type=jnp.float32)
    h = jnp.maximum(h + b2_ref[...], 0.0)
    # Q head: output last dim is action_dim (no lane padding); masked store is fine here.
    q = jnp.dot(h.astype(w3_ref.dtype), w3_ref[...], preferred_element_type=jnp.float32)
    out_ref[...] = (q + b3_ref[...]).astype(out_ref.dtype)


def net_forward(obs, params, *, block_m=1024, target_steps=4):
    """obs: (B, state_dim) float32. params: dict of (in, out)-transposed weights/biases.

    Weights may be f32 or bf16 (see cast_weights_for_mxu); biases must be f32.
    """
    w1, b1, w2, b2, w3, b3 = (
        params["w1"], params["b1"], params["w2"],
        params["b2"], params["w3"], params["b3"],
    )
    B, state_dim = obs.shape
    hidden = w1.shape[1]
    action_dim = w3.shape[1]

    # Batch tiling: aim for >= target_steps grid steps (megacore sharding on v7x +
    # pipeline overlap), cap at block_m, and always clamp tm to a multiple of 8 sublanes.
    tm = min(block_m, pl.cdiv(B, target_steps))
    tm = _round_up(max(tm, SUBLANE), SUBLANE)
    grid = (pl.cdiv(B, tm),)   # last tile may be partial: over-read input, masked writeback

    flops = 2 * B * (state_dim * hidden + hidden * hidden + hidden * action_dim)
    bytes_accessed = (
        obs.size * obs.dtype.itemsize
        + sum(a.size * a.dtype.itemsize for a in (w1, b1, w2, b2, w3, b3))
        + B * action_dim * 4
    )

    # VMEM budget (tm=1024, hidden=256, bf16 weights): 2x (1024,16) obs tiles + 2x (1024,8)
    # out tiles + ~0.3 MiB resident weights + ~2 MiB f32 activations -- far under the
    # scoped-VMEM default on v5e/v6e/v7x, so no vmem_limit_bytes override is needed.
    out = pl.pallas_call(
        _mlp_kernel,
        out_shape=jax.ShapeDtypeStruct((B, action_dim), jnp.float32),
        grid_spec=pltpu.PrefetchScalarGridSpec(
            num_scalar_prefetch=0,
            grid=grid,
            in_specs=[
                pl.BlockSpec((tm, state_dim), lambda i: (i, 0)),        # obs tile (pipelined)
                pl.BlockSpec((state_dim, hidden), lambda i: (0, 0)),    # resident weights
                pl.BlockSpec((1, hidden), lambda i: (0, 0)),
                pl.BlockSpec((hidden, hidden), lambda i: (0, 0)),
                pl.BlockSpec((1, hidden), lambda i: (0, 0)),
                pl.BlockSpec((hidden, action_dim), lambda i: (0, 0)),   # full-dim last axis
                pl.BlockSpec((1, action_dim), lambda i: (0, 0)),
            ],
            out_specs=pl.BlockSpec((tm, action_dim), lambda i: (i, 0)),
        ),
        compiler_params=pltpu.CompilerParams(
            dimension_semantics=("parallel",),   # shard batch tiles across TCs on v7x
        ),
        cost_estimate=pl.CostEstimate(
            flops=flops, transcendentals=0, bytes_accessed=bytes_accessed,
        ),
    )(obs, w1, b1, w2, b2, w3, b3)

    return out


def init_params(key, state_dim, action_dim, hidden_dim):
    """Deterministic init; weights stored as (in, out) — transposed vs PyTorch (out, in)."""
    ks = jax.random.split(key, 6)

    def linear(kw, kb, fan_in, fan_out):
        bound = 1.0 / jnp.sqrt(fan_in)
        w = jax.random.uniform(kw, (fan_in, fan_out), jnp.float32, -bound, bound)
        b = jax.random.uniform(kb, (1, fan_out), jnp.float32, -bound, bound)
        return w, b

    w1, b1 = linear(ks[0], ks[1], state_dim, hidden_dim)
    w2, b2 = linear(ks[2], ks[3], hidden_dim, hidden_dim)
    w3, b3 = linear(ks[4], ks[5], hidden_dim, action_dim)
    return {"w1": w1, "b1": b1, "w2": w2, "b2": b2, "w3": w3, "b3": b3}


def cast_weights_for_mxu(params, dtype=jnp.bfloat16):
    """One-time weight cast for the MXU fast path (all generations, incl. v5e).

    Call this OUTSIDE the jit hot path so the cast is not re-done every forward.
    Biases stay f32 (the whole elementwise epilogue runs in f32 on the VPU).
    """
    out = dict(params)
    for k in ("w1", "w2", "w3"):
        out[k] = params[k].astype(dtype)
    return out


def _reference(obs, p):
    h1 = jnp.maximum(obs @ p["w1"] + p["b1"], 0.0)
    h2 = jnp.maximum(h1 @ p["w2"] + p["b2"], 0.0)
    return h2 @ p["w3"] + p["b3"]


if __name__ == "__main__":
    # Module-default hidden_dim=256; small obs batch consistent with the forward.
    batch, state_dim, hidden_dim, action_dim = 8, 16, 256, 8

    key = jax.random.PRNGKey(0)
    k_obs, k_params, k_obs_big = jax.random.split(key, 3)
    obs = jax.random.normal(k_obs, (batch, state_dim), jnp.float32)

    params_f32 = init_params(k_params, state_dim, action_dim, hidden_dim)
    params_bf16 = cast_weights_for_mxu(params_f32)   # once, outside the jit hot path

    fwd = jax.jit(net_forward)

    # Small-batch f32 path (single grid step), tight tolerance.
    q_values = fwd(obs, params_f32)
    jax.block_until_ready(q_values)
    ref = _reference(obs, params_f32)
    assert q_values.shape == (batch, action_dim)
    assert jnp.allclose(q_values, ref, atol=1e-4, rtol=1e-4)

    # Ragged multi-step grid: B=1000 -> 4 tiles of 256 rows, last tile partial (no pre-pad,
    # no output slice).  f32 weights, tight tolerance.
    big_batch = 1000
    obs_big = jax.random.normal(k_obs_big, (big_batch, state_dim), jnp.float32)
    q_big = fwd(obs_big, params_f32)
    jax.block_until_ready(q_big)
    ref_big = _reference(obs_big, params_f32)
    assert q_big.shape == (big_batch, action_dim)
    assert jnp.allclose(q_big, ref_big, atol=1e-4, rtol=1e-4)

    # bf16-MXU fast path (default for all generations), f32 accumulation — loose tolerance.
    q_bf16 = fwd(obs_big, params_bf16)
    jax.block_until_ready(q_bf16)
    assert q_bf16.shape == (big_batch, action_dim)
    assert jnp.allclose(q_bf16, ref_big, atol=1e-1, rtol=1e-1)

    print("KERNEL_OK")
</pallas_src>

<mosaic_0001>
module attributes {stable_mosaic.version = 11 : i64} {
  func.func @_mlp_kernel(%arg0: i32, %arg1: memref<8x16xf32, #tpu.memory_space<vmem>>, %arg2: memref<16x256xf32, #tpu.memory_space<vmem>>, %arg3: memref<1x256xf32, #tpu.memory_space<vmem>>, %arg4: memref<256x256xf32, #tpu.memory_space<vmem>>, %arg5: memref<1x256xf32, #tpu.memory_space<vmem>>, %arg6: memref<256x8xf32, #tpu.memory_space<vmem>>, %arg7: memref<1x8xf32, #tpu.memory_space<vmem>>, %arg8: memref<8x8xf32, #tpu.memory_space<vmem>>) attributes {dimension_semantics = [#tpu.dimension_semantics<parallel>], iteration_bounds = array<i64: 1>, scalar_prefetch = 0 : i64, scratch_operands = 0 : i64, tpu.core_type = #tpu.core_type<tc>, window_params = [{transform_indices = @transform_0, window_bounds = array<i64: 8, 16>}, {pipeline_mode = #tpu.pipeline_mode<synchronous>, transform_indices = @transform_1, window_bounds = array<i64: 16, 256>}, {pipeline_mode = #tpu.pipeline_mode<synchronous>, transform_indices = @transform_2, window_bounds = array<i64: 1, 256>}, {pipeline_mode = #tpu.pipeline_mode<synchronous>, transform_indices = @transform_3, window_bounds = array<i64: 256, 256>}, {pipeline_mode = #tpu.pipeline_mode<synchronous>, transform_indices = @transform_4, window_bounds = array<i64: 1, 256>}, {pipeline_mode = #tpu.pipeline_mode<synchronous>, transform_indices = @transform_5, window_bounds = array<i64: 256, 8>}, {pipeline_mode = #tpu.pipeline_mode<synchronous>, transform_indices = @transform_6, window_bounds = array<i64: 1, 8>}, {transform_indices = @transform_7, window_bounds = array<i64: 8, 8>}]} {
    %c0 = arith.constant 0 : index
    %c0_0 = arith.constant 0 : index
    %0 = vector.load %arg1[%c0, %c0_0] : memref<8x16xf32, #tpu.memory_space<vmem>>, vector<8x16xf32>
    %c0_1 = arith.constant 0 : index
    %c0_2 = arith.constant 0 : index
    %1 = vector.load %arg2[%c0_1, %c0_2] : memref<16x256xf32, #tpu.memory_space<vmem>>, vector<16x256xf32>
    %cst = arith.constant dense<0.000000e+00> : vector<8x256xf32>
    %2 = tpu.matmul %0, %1, %cst {dimension_numbers = #tpu.dot_dimension_numbers<[1], [0], [0], [1], [0, 0, 1, 1], [], []>} : vector<8x16xf32>, vector<16x256xf32>, vector<8x256xf32> -> vector<8x256xf32>
    %c0_3 = arith.constant 0 : index
    %c0_4 = arith.constant 0 : index
    %3 = vector.load %arg3[%c0_3, %c0_4] : memref<1x256xf32, #tpu.memory_space<vmem>>, vector<1x256xf32>
    %4 = vector.broadcast %3 : vector<1x256xf32> to vector<8x256xf32>
    %5 = arith.addf %2, %4 : vector<8x256xf32>
    %cst_5 = arith.constant 0.000000e+00 : f32
    %6 = vector.broadcast %cst_5 : f32 to vector<8x256xf32>
    %7 = arith.maximumf %5, %6 : vector<8x256xf32>
    %c0_6 = arith.constant 0 : index
    %c0_7 = arith.constant 0 : index
    %8 = vector.load %arg4[%c0_6, %c0_7] : memref<256x256xf32, #tpu.memory_space<vmem>>, vector<256x256xf32>
    %cst_8 = arith.constant dense<0.000000e+00> : vector<8x256xf32>
    %9 = tpu.matmul %7, %8, %cst_8 {dimension_numbers = #tpu.dot_dimension_numbers<[1], [0], [0], [1], [0, 0, 1, 1], [], []>} : vector<8x256xf32>, vector<256x256xf32>, vector<8x256xf32> -> vector<8x256xf32>
    %c0_9 = arith.constant 0 : index
    %c0_10 = arith.constant 0 : index
    %10 = vector.load %arg5[%c0_9, %c0_10] : memref<1x256xf32, #tpu.memory_space<vmem>>, vector<1x256xf32>
    %11 = vector.broadcast %10 : vector<1x256xf32> to vector<8x256xf32>
    %12 = arith.addf %9, %11 : vector<8x256xf32>
    %cst_11 = arith.constant 0.000000e+00 : f32
    %13 = vector.broadcast %cst_11 : f32 to vector<8x256xf32>
    %14 = arith.maximumf %12, %13 : vector<8x256xf32>
    %c0_12 = arith.constant 0 : index
    %c0_13 = arith.constant 0 : index
    %15 = vector.load %arg6[%c0_12, %c0_13] : memref<256x8xf32, #tpu.memory_space<vmem>>, vector<256x8xf32>
    %cst_14 = arith.constant dense<0.000000e+00> : vector<8x8xf32>
    %16 = tpu.matmul %14, %15, %cst_14 {dimension_numbers = #tpu.dot_dimension_numbers<[1], [0], [0], [1], [0, 0, 1, 1], [], []>} : vector<8x256xf32>, vector<256x8xf32>, vector<8x8xf32> -> vector<8x8xf32>
    %c0_15 = arith.constant 0 : index
    %c0_16 = arith.constant 0 : index
    %17 = vector.load %arg7[%c0_15, %c0_16] : memref<1x8xf32, #tpu.memory_space<vmem>>, vector<1x8xf32>
    %18 = vector.broadcast %17 : vector<1x8xf32> to vector<8x8xf32>
    %19 = arith.addf %16, %18 : vector<8x8xf32>
    %c0_17 = arith.constant 0 : index
    %c0_18 = arith.constant 0 : index
    %20 = vector.load %arg8[%c0_17, %c0_18] : memref<8x8xf32, #tpu.memory_space<vmem>>, vector<8x8xf32>
    tpu.vector_store %arg8[%c0_17, %c0_18], %19 {strides = array<i32>} : memref<8x8xf32, #tpu.memory_space<vmem>>, vector<8x8xf32>,
    return
  }
  func.func @transform_0(%arg0: i32) -> (i32, i32) {
    %c0_i32 = arith.constant 0 : i32
    %c0_i32_0 = arith.constant 0 : i32
    return %arg0, %c0_i32 : i32, i32
  }
  func.func @transform_1(%arg0: i32) -> (i32, i32) {
    %c0_i32 = arith.constant 0 : i32
    %c0_i32_0 = arith.constant 0 : i32
    %c0_i32_1 = arith.constant 0 : i32
    return %c0_i32, %c0_i32_0 : i32, i32
  }
  func.func @transform_2(%arg0: i32) -> (i32, i32) {
    %c0_i32 = arith.constant 0 : i32
    %c0_i32_0 = arith.constant 0 : i32
    %c0_i32_1 = arith.constant 0 : i32
    return %c0_i32, %c0_i32_0 : i32, i32
  }
  func.func @transform_3(%arg0: i32) -> (i32, i32) {
    %c0_i32 = arith.constant 0 : i32
    %c0_i32_0 = arith.constant 0 : i32
    %c0_i32_1 = arith.constant 0 : i32
    return %c0_i32, %c0_i32_0 : i32, i32
  }
  func.func @transform_4(%arg0: i32) -> (i32, i32) {
    %c0_i32 = arith.constant 0 : i32
    %c0_i32_0 = arith.constant 0 : i32
    %c0_i32_1 = arith.constant 0 : i32
    return %c0_i32, %c0_i32_0 : i32, i32
  }
  func.func @transform_5(%arg0: i32) -> (i32, i32) {
    %c0_i32 = arith.constant 0 : i32
    %c0_i32_0 = arith.constant 0 : i32
    %c0_i32_1 = arith.constant 0 : i32
    return %c0_i32, %c0_i32_0 : i32, i32
  }
  func.func @transform_6(%arg0: i32) -> (i32, i32) {
    %c0_i32 = arith.constant 0 : i32
    %c0_i32_0 = arith.constant 0 : i32
    %c0_i32_1 = arith.constant 0 : i32
    return %c0_i32, %c0_i32_0 : i32, i32
  }
  func.func @transform_7(%arg0: i32) -> (i32, i32) {
    %c0_i32 = arith.constant 0 : i32
    %c0_i32_0 = arith.constant 0 : i32
    return %arg0, %c0_i32 : i32, i32
  }
}

</mosaic_0001>

<llo_original>
// kernel: net_forward.1
$region0: #{net_forward.1}
  #allocation0 [shape = 'u32[]', space=smem, size = 0x4, offset = 0x4, fixed_abs, tag = 'smem constant byte address 0x4 - core index']
  #allocation1 [shape = 'u32[144,128]{1,0:T(1,128)}', space=vmem, size = 0x12000, scoped, tag = 'internal scratch']
  %s0 = inlined_call_operand.vmem [shape: f32[8,16], index: 0, kind: input, shape index: {}]
  %s1 = inlined_call_operand.vmem [shape: f32[16,256], index: 1, kind: input, shape index: {}]
  %s2 = inlined_call_operand.vmem [shape: f32[1,256], index: 2, kind: input, shape index: {}]
  %s3 = inlined_call_operand.hbm [shape: f32[256,256], index: 3, kind: input, shape index: {}]
  %s4 = inlined_call_operand.vmem [shape: f32[1,256], index: 4, kind: input, shape index: {}]
  %s5 = inlined_call_operand.vmem [shape: f32[256,8], index: 5, kind: input, shape index: {}]
  %s6 = inlined_call_operand.vmem [shape: f32[1,8], index: 6, kind: input, shape index: {}]
  %s7 = inlined_call_operand.hbm [shape: f32[8,8], index: 7, kind: output, shape index: {}]
  %s8 = sld [smem:[#allocation0]]
  $region42: #{net_forward.1} parent=0
    _
  %s10 = ssub.s32 1, %s8
  %s11 = scalar_select 0, %s10, %s8
  $region1: #{net_forward.1} parent=0
    #allocation2 [shape = 'u8[262144]{0}', space=vmem, size = 0x40000, scoped, tag = 'input window, operand 3, single buffered']
    #allocation3 [shape = 's32[1]{0}', space=sflag, size = 0x4, scoped, tag = 'scoped memory for net_forward.1']
    #allocation4 [shape = 's32[1]{0}', space=sflag, size = 0x4, scoped, tag = 'scoped memory for net_forward.1']
    #allocation5 [shape = 'u8[4096]{0}', space=vmem, size = 0x1000, scoped, tag = 'output window, operand 0, single buffered']
    %12 = vsyncpa [#allocation3], 0
    %13 = vsyncpa [#allocation4], 0
    // Predicated region
    $region2: #{net_forward.1} parent=1 // pred_check
      _
    $region3: #{net_forward.1} parent=1 // pred_check_branch
      %15 = sbr.rel (0) target = $region5
    $region4: #{net_forward.1} parent=1 // pred_region
      _
    $region5: #{net_forward.1} parent=1 // pred_fallthru
      _
    // Predicated region
    $region6: #{net_forward.1} parent=1 // pred_check
      _
    $region7: #{net_forward.1} parent=1 // pred_check_branch
      %17 = sbr.rel (0) target = $region9
    $region8: #{net_forward.1} parent=1 // pred_region
      _
    $region9: #{net_forward.1} parent=1 // pred_fallthru
      _
    // Predicated region
    $region10: #{net_forward.1} parent=1 // pred_check
      _
    $region11: #{net_forward.1} parent=1 // pred_check_branch
      %19 = sbr.rel (0) target = $region13
    $region12: #{net_forward.1} parent=1 // pred_region
      _
    $region13: #{net_forward.1} parent=1 // pred_fallthru
      _
    // Predicated region
    $region14: #{net_forward.1} parent=1 // pred_check
      _
    $region15: #{net_forward.1} parent=1 // pred_check_branch
      %21 = sbr.rel (0) target = $region17
    $region16: #{net_forward.1} parent=1 // pred_region
      %s23 = ssub.s32 8192, 8192
      %24 = vsyncadd [#allocation3], %s23
      %s25 = sshll.u32 [#allocation2], 4
      %s26 = int_to_ptr.vmem [resolvable:$true] %s25
      %31 = dma.hbm_to_vmem [thread:$0]  %s3, 8192, %s26, [#allocation3], 256, 256, 16
    $region17: #{net_forward.1} parent=1 // pred_fallthru
      _
    // Predicated region
    $region18: #{net_forward.1} parent=1 // pred_check
      _
    $region19: #{net_forward.1} parent=1 // pred_check_branch
      %33 = sbr.rel (0) target = $region21
    $region20: #{net_forward.1} parent=1 // pred_region
      _
    $region21: #{net_forward.1} parent=1 // pred_fallthru
      _
    // Predicated region
    $region22: #{net_forward.1} parent=1 // pred_check
      _
    $region23: #{net_forward.1} parent=1 // pred_check_branch
      %35 = sbr.rel (0) target = $region25
    $region24: #{net_forward.1} parent=1 // pred_region
      _
    $region25: #{net_forward.1} parent=1 // pred_fallthru
      _
    // Predicated region
    $region26: #{net_forward.1} parent=1 // pred_check
      _
    $region27: #{net_forward.1} parent=1 // pred_check_branch
      %37 = sbr.rel (0) target = $region29
    $region28: #{net_forward.1} parent=1 // pred_region
      _
    $region29: #{net_forward.1} parent=1 // pred_fallthru
      _
    // Predicated region
    $region30: #{net_forward.1} parent=1 // pred_check
      _
    $region31: #{net_forward.1} parent=1 // pred_check_branch
      %39 = sbr.rel (0) target = $region33
    $region32: #{net_forward.1} parent=1 // pred_region
      %40 = dma.done [#allocation3], 8192
    $region33: #{net_forward.1} parent=1 // pred_fallthru
      _
    %v41 = vld [vmem:[%s0] sm:$0xff]
    %v42 = vld [vmem:[%s1] sm:$0xff]
    %v43 = vld [vmem:[%s1 + $0x8] sm:$0xff]
    %v44 = vld [vmem:[%s1 + $0x10] sm:$0xff]
    %v45 = vld [vmem:[%s1 + $0x18] sm:$0xff]
    %v46 = vld [vmem:[%s2] sm:$0x3]
    %v48 = vlaneseq
    %v49 = vshrl.u32 %v48, 7
    %v50 = vsub.s32 0, %v49
    %v51 = vrot.slane %v46, %v50
    %v52 = vlaneseq
    %v53 = vshrl.u32 %v52, 7
    %v54 = vsub.s32 1, %v53
    %v55 = vrot.slane %v46, %v54
    %vm58 = vcmask 130048
    %v60 = vsel %vm58, %v41, 0
    %62 = vmatprep.subr.mxu0 %v43
    %63 = vmatpush1.msra.mxu0 %v42
    %64 = vmatprep.subr.mxu0 %v45
    %65 = vmatpush1.msra.mxu0 %v44
    %66 = vmatprep.subr.mxu0 0.0
    %67 = vmatpush1.msra.mxu0 0.0
    %68 = vmatprep.subr.mxu0 0.0
    %69 = vmatpush1.msra.mxu0 0.0
    %70 = vmatprep.subr.mxu0 0.0
    %71 = vmatpush1.msra.mxu0 0.0
    %72 = vmatprep.subr.mxu0 0.0
    %73 = vmatpush1.msra.mxu0 0.0
    %74 = vmatprep.subr.mxu0 0.0
    %75 = vmatpush1.msra.mxu0 0.0
    %76 = vmatprep.subr.mxu0 0.0
    %77 = vmatpush1.msra.mxu0 0.0
    %78 = vmatprep.subr.mxu0 0.0
    %79 = vmatpush1.msra.mxu0 0.0
    %80 = vmatprep.subr.mxu0 0.0
    %81 = vmatpush1.msra.mxu0 0.0
    %82 = vmatprep.subr.mxu0 0.0
    %83 = vmatpush1.msra.mxu0 0.0
    %84 = vmatprep.subr.mxu0 0.0
    %85 = vmatpush1.msra.mxu0 0.0
    %86 = vmatprep.subr.mxu0 0.0
    %87 = vmatpush1.msra.mxu0 0.0
    %88 = vmatprep.subr.mxu0 0.0
    %89 = vmatpush1.msra.mxu0 0.0
    %90 = vmatprep.subr.mxu0 0.0
    %91 = vmatpush1.msra.mxu0 0.0
    %92 = vmatprep.subr.mxu0 0.0
    %93 = vmatpush1.msra.mxu0 0.0
    %94 = vmatprep.subr.mxu0 0.0
    %95 = vmatpush1.msra.mxu0 0.0
    %96 = vmatprep.subr.mxu0 0.0
    %97 = vmatpush1.msra.mxu0 0.0
    %98 = vmatprep.subr.mxu0 0.0
    %99 = vmatpush1.msra.mxu0 0.0
    %100 = vmatprep.subr.mxu0 0.0
    %101 = vmatpush1.msra.mxu0 0.0
    %102 = vmatprep.subr.mxu0 0.0
    %103 = vmatpush1.msra.mxu0 0.0
    %104 = vmatprep.subr.mxu0 0.0
    %105 = vmatpush1.msra.mxu0 0.0
    %106 = vmatprep.subr.mxu0 0.0
    %107 = vmatpush1.msra.mxu0 0.0
    %108 = vmatprep.subr.mxu0 0.0
    %109 = vmatpush1.msra.mxu0 0.0
    %110 = vmatprep.subr.mxu0 0.0
    %111 = vmatpush1.msra.mxu0 0.0
    %112 = vmatprep.subr.mxu0 0.0
    %113 = vmatpush1.msra.mxu0 0.0
    %114 = vmatprep.subr.mxu0 0.0
    %115 = vmatpush1.msra.mxu0 0.0
    %116 = vmatprep.subr.mxu0 0.0
    %117 = vmatpush1.msra.mxu0 0.0
    %118 = vmatprep.subr.mxu0 0.0
    %119 = vmatpush1.msra.mxu0 0.0
    %120 = vmatprep.subr.mxu0 0.0
    %121 = vmatpush1.msra.mxu0 0.0
    %122 = vmatprep.subr.mxu0 0.0
    %123 = vmatpush1.msra.mxu0 0.0
    %124 = vmatprep.subr.mxu0 0.0
    %125 = vmatpush1.msra.mxu0 0.0
    %126 = vmatprep.mubr.f32.mxu0 0.0
    %127 = vmatmul.mubr.f32.gmra.mrb[0].mxu0 %v60
    %v128 = vpop.f32.mrb[0].mxu0
    %v129 = vadd.f32 %v51, %v128
    %v130 = vpop.f32.mrb[0].mxu0
    %v131 = vadd.f32 %v55, %v130
    %132 = vdwg.mxu0
    %v133 = vmax.f32 %v129, 0.0
    %v134 = vmax.f32 %v131, 0.0
    %v135 = vld [vmem:[#allocation2] sm:$0xff]
    %v136 = vld [vmem:[#allocation2 + $0x8] sm:$0xff]
    %v137 = vld [vmem:[#allocation2 + $0x10] sm:$0xff]
    %v138 = vld [vmem:[#allocation2 + $0x18] sm:$0xff]
    %v139 = vld [vmem:[#allocation2 + $0x20] sm:$0xff]
    %v140 = vld [vmem:[#allocation2 + $0x28] sm:$0xff]
    %v141 = vld [vmem:[#allocation2 + $0x30] sm:$0xff]
    %v142 = vld [vmem:[#allocation2 + $0x38] sm:$0xff]
    %v143 = vld [vmem:[#allocation2 + $0x40] sm:$0xff]
    %v144 = vld [vmem:[#allocation2 + $0x48] sm:$0xff]
    %v145 = vld [vmem:[#allocation2 + $0x50] sm:$0xff]
    %v146 = vld [vmem:[#allocation2 + $0x58] sm:$0xff]
    %v147 = vld [vmem:[#allocation2 + $0x60] sm:$0xff]
    %v148 = vld [vmem:[#allocation2 + $0x68] sm:$0xff]
    %v149 = vld [vmem:[#allocation2 + $0x70] sm:$0xff]
    %v150 = vld [vmem:[#allocation2 + $0x78] sm:$0xff]
    %v151 = vld [vmem:[#allocation2 + $0x80] sm:$0xff]
    %v152 = vld [vmem:[#allocation2 + $0x88] sm:$0xff]
    %v153 = vld [vmem:[#allocation2 + $0x90] sm:$0xff]
    %v154 = vld [vmem:[#allocation2 + $0x98] sm:$0xff]
    %v155 = vld [vmem:[#allocation2 + $0xa0] sm:$0xff]
    %v156 = vld [vmem:[#allocation2 + $0xa8] sm:$0xff]
    %v157 = vld [vmem:[#allocation2 + $0xb0] sm:$0xff]
    %v158 = vld [vmem:[#allocation2 + $0xb8] sm:$0xff]
    %v159 = vld [vmem:[#allocation2 + $0xc0] sm:$0xff]
    %v160 = vld [vmem:[#allocation2 + $0xc8] sm:$0xff]
    %v161 = vld [vmem:[#allocation2 + $0xd0] sm:$0xff]
    %v162 = vld [vmem:[#allocation2 + $0xd8] sm:$0xff]
    %v163 = vld [vmem:[#allocation2 + $0xe0] sm:$0xff]
    %v164 = vld [vmem:[#allocation2 + $0xe8] sm:$0xff]
    %v165 = vld [vmem:[#allocation2 + $0xf0] sm:$0xff]
    %v166 = vld [vmem:[#allocation2 + $0xf8] sm:$0xff]
    %v167 = vld [vmem:[#allocation2 + $0x100] sm:$0xff]
    %v168 = vld [vmem:[#allocation2 + $0x108] sm:$0xff]
    %v169 = vld [vmem:[#allocation2 + $0x110] sm:$0xff]
    %v170 = vld [vmem:[#allocation2 + $0x118] sm:$0xff]
    %v171 = vld [vmem:[#allocation2 + $0x120] sm:$0xff]
    %v172 = vld [vmem:[#allocation2 + $0x128] sm:$0xff]
    %v173 = vld [vmem:[#allocation2 + $0x130] sm:$0xff]
    %v174 = vld [vmem:[#allocation2 + $0x138] sm:$0xff]
    %v175 = vld [vmem:[#allocation2 + $0x140] sm:$0xff]
    %v176 = vld [vmem:[#allocation2 + $0x148] sm:$0xff]
    %v177 = vld [vmem:[#allocation2 + $0x150] sm:$0xff]
    %v178 = vld [vmem:[#allocation2 + $0x158] sm:$0xff]
    %v179 = vld [vmem:[#allocation2 + $0x160] sm:$0xff]
    %v180 = vld [vmem:[#allocation2 + $0x168] sm:$0xff]
    %v181 = vld [vmem:[#allocation2 + $0x170] sm:$0xff]
    %v182 = vld [vmem:[#allocation2 + $0x178] sm:$0xff]
    %v183 = vld [vmem:[#allocation2 + $0x180] sm:$0xff]
    %v184 = vld [vmem:[#allocation2 + $0x188] sm:$0xff]
    %v185 = vld [vmem:[#allocation2 + $0x190] sm:$0xff]
    %v186 = vld [vmem:[#allocation2 + $0x198] sm:$0xff]
    %v187 = vld [vmem:[#allocation2 + $0x1a0] sm:$0xff]
    %v188 = vld [vmem:[#allocation2 + $0x1a8] sm:$0xff]
    %v189 = vld [vmem:[#allocation2 + $0x1b0] sm:$0xff]
    %v190 = vld [vmem:[#allocation2 + $0x1b8] sm:$0xff]
    %v191 = vld [vmem:[#allocation2 + $0x1c0] sm:$0xff]
    %v192 = vld [vmem:[#allocation2 + $0x1c8] sm:$0xff]
    %v193 = vld [vmem:[#allocation2 + $0x1d0] sm:$0xff]
    %v194 = vld [vmem:[#allocation2 + $0x1d8] sm:$0xff]
    %v195 = vld [vmem:[#allocation2 + $0x1e0] sm:$0xff]
    %v196 = vld [vmem:[#allocation2 + $0x1e8] sm:$0xff]
    %v197 = vld [vmem:[#allocation2 + $0x1f0] sm:$0xff]
    %v198 = vld [vmem:[#allocation2 + $0x1f8] sm:$0xff]
    %v199 = vld [vmem:[%s4] sm:$0x3]
    %v201 = vlaneseq
    %v202 = vshrl.u32 %v201, 7
    %v203 = vsub.s32 0, %v202
    %v204 = vrot.slane %v199, %v203
    %v205 = vlaneseq
    %v206 = vshrl.u32 %v205, 7
    %v207 = vsub.s32 1, %v206
    %v208 = vrot.slane %v199, %v207
    %211 = vmatprep.subr.mxu0 %v136
    %212 = vmatpush1.msra.mxu0 %v135
    %213 = vmatprep.subr.mxu0 %v138
    %214 = vmatpush1.msra.mxu0 %v137
    %215 = vmatprep.subr.mxu0 %v140
    %216 = vmatpush1.msra.mxu0 %v139
    %217 = vmatprep.subr.mxu0 %v142
    %218 = vmatpush1.msra.mxu0 %v141
    %219 = vmatprep.subr.mxu0 %v144
    %220 = vmatpush1.msra.mxu0 %v143
    %221 = vmatprep.subr.mxu0 %v146
    %222 = vmatpush1.msra.mxu0 %v145
    %223 = vmatprep.subr.mxu0 %v148
    %224 = vmatpush1.msra.mxu0 %v147
    %225 = vmatprep.subr.mxu0 %v150
    %226 = vmatpush1.msra.mxu0 %v149
    %227 = vmatprep.subr.mxu0 %v152
    %228 = vmatpush1.msra.mxu0 %v151
    %229 = vmatprep.subr.mxu0 %v154
    %230 = vmatpush1.msra.mxu0 %v153
    %231 = vmatprep.subr.mxu0 %v156
    %232 = vmatpush1.msra.mxu0 %v155
    %233 = vmatprep.subr.mxu0 %v158
    %234 = vmatpush1.msra.mxu0 %v157
    %235 = vmatprep.subr.mxu0 %v160
    %236 = vmatpush1.msra.mxu0 %v159
    %237 = vmatprep.subr.mxu0 %v162
    %238 = vmatpush1.msra.mxu0 %v161
    %239 = vmatprep.subr.mxu0 %v164
    %240 = vmatpush1.msra.mxu0 %v163
    %241 = vmatprep.subr.mxu0 %v166
    %242 = vmatpush1.msra.mxu0 %v165
    %243 = vmatprep.subr.mxu0 %v168
    %244 = vmatpush1.msra.mxu0 %v167
    %245 = vmatprep.subr.mxu0 %v170
    %246 = vmatpush1.msra.mxu0 %v169
    %247 = vmatprep.subr.mxu0 %v172
    %248 = vmatpush1.msra.mxu0 %v171
    %249 = vmatprep.subr.mxu0 %v174
    %250 = vmatpush1.msra.mxu0 %v173
    %251 = vmatprep.subr.mxu0 %v176
    %252 = vmatpush1.msra.mxu0 %v175
    %253 = vmatprep.subr.mxu0 %v178
    %254 = vmatpush1.msra.mxu0 %v177
    %255 = vmatprep.subr.mxu0 %v180
    %256 = vmatpush1.msra.mxu0 %v179
    %257 = vmatprep.subr.mxu0 %v182
    %258 = vmatpush1.msra.mxu0 %v181
    %259 = vmatprep.subr.mxu0 %v184
    %260 = vmatpush1.msra.mxu0 %v183
    %261 = vmatprep.subr.mxu0 %v186
    %262 = vmatpush1.msra.mxu0 %v185
    %263 = vmatprep.subr.mxu0 %v188
    %264 = vmatpush1.msra.mxu0 %v187
    %265 = vmatprep.subr.mxu0 %v190
    %266 = vmatpush1.msra.mxu0 %v189
    %267 = vmatprep.subr.mxu0 %v192
    %268 = vmatpush1.msra.mxu0 %v191
    %269 = vmatprep.subr.mxu0 %v194
    %270 = vmatpush1.msra.mxu0 %v193
    %271 = vmatprep.subr.mxu0 %v196
    %272 = vmatpush1.msra.mxu0 %v195
    %273 = vmatprep.subr.mxu0 %v198
    %274 = vmatpush1.msra.mxu0 %v197
    %275 = vmatprep.mubr.f32.mxu0 %v134
    %276 = vmatmul.mubr.f32.gmra.mrb[0].mxu0 %v133
    %v277 = vpop.f32.mrb[0].mxu0
    %v278 = vadd.f32 %v204, %v277
    %v279 = vpop.f32.mrb[0].mxu0
    %v280 = vadd.f32 %v208, %v279
    %281 = vdwg.mxu0
    %v282 = vmax.f32 %v278, 0.0
    %v283 = vmax.f32 %v280, 0.0
    %v284 = vld [vmem:[%s5] sm:$0xff]
    %v285 = vld [vmem:[%s5 + $0x8] sm:$0xff]
    %v286 = vld [vmem:[%s5 + $0x10] sm:$0xff]
    %v287 = vld [vmem:[%s5 + $0x18] sm:$0xff]
    %v288 = vld [vmem:[%s5 + $0x20] sm:$0xff]
    %v289 = vld [vmem:[%s5 + $0x28] sm:$0xff]
    %v290 = vld [vmem:[%s5 + $0x30] sm:$0xff]
    %v291 = vld [vmem:[%s5 + $0x38] sm:$0xff]
    %v292 = vld [vmem:[%s5 + $0x40] sm:$0xff]
    %v293 = vld [vmem:[%s5 + $0x48] sm:$0xff]
    %v294 = vld [vmem:[%s5 + $0x50] sm:$0xff]
    %v295 = vld [vmem:[%s5 + $0x58] sm:$0xff]
    %v296 = vld [vmem:[%s5 + $0x60] sm:$0xff]
    %v297 = vld [vmem:[%s5 + $0x68] sm:$0xff]
    %v298 = vld [vmem:[%s5 + $0x70] sm:$0xff]
    %v299 = vld [vmem:[%s5 + $0x78] sm:$0xff]
    %v300 = vld [vmem:[%s5 + $0x80] sm:$0xff]
    %v301 = vld [vmem:[%s5 + $0x88] sm:$0xff]
    %v302 = vld [vmem:[%s5 + $0x90] sm:$0xff]
    %v303 = vld [vmem:[%s5 + $0x98] sm:$0xff]
    %v304 = vld [vmem:[%s5 + $0xa0] sm:$0xff]
    %v305 = vld [vmem:[%s5 + $0xa8] sm:$0xff]
    %v306 = vld [vmem:[%s5 + $0xb0] sm:$0xff]
    %v307 = vld [vmem:[%s5 + $0xb8] sm:$0xff]
    %v308 = vld [vmem:[%s5 + $0xc0] sm:$0xff]
    %v309 = vld [vmem:[%s5 + $0xc8] sm:$0xff]
    %v310 = vld [vmem:[%s5 + $0xd0] sm:$0xff]
    %v311 = vld [vmem:[%s5 + $0xd8] sm:$0xff]
    %v312 = vld [vmem:[%s5 + $0xe0] sm:$0xff]
    %v313 = vld [vmem:[%s5 + $0xe8] sm:$0xff]
    %v314 = vld [vmem:[%s5 + $0xf0] sm:$0xff]
    %v315 = vld [vmem:[%s5 + $0xf8] sm:$0xff]
    %v316 = vld [vmem:[%s6] sm:$0x1]
    %v318 = vlaneseq
    %v319 = vshrl.u32 %v318, 7
    %v320 = vsub.s32 0, %v319
    %v321 = vrot.slane %v316, %v320
    %323 = vmatprep.subr.mxu0 0.0
    %324 = vmatpush1.msra.mxu0 %v284
    %325 = vmatprep.subr.mxu0 0.0
    %326 = vmatpush1.msra.mxu0 %v285
    %327 = vmatprep.subr.mxu0 0.0
    %328 = vmatpush1.msra.mxu0 %v286
    %329 = vmatprep.subr.mxu0 0.0
    %330 = vmatpush1.msra.mxu0 %v287
    %331 = vmatprep.subr.mxu0 0.0
    %332 = vmatpush1.msra.mxu0 %v288
    %333 = vmatprep.subr.mxu0 0.0
    %334 = vmatpush1.msra.mxu0 %v289
    %335 = vmatprep.subr.mxu0 0.0
    %336 = vmatpush1.msra.mxu0 %v290
    %337 = vmatprep.subr.mxu0 0.0
    %338 = vmatpush1.msra.mxu0 %v291
    %339 = vmatprep.subr.mxu0 0.0
    %340 = vmatpush1.msra.mxu0 %v292
    %341 = vmatprep.subr.mxu0 0.0
    %342 = vmatpush1.msra.mxu0 %v293
    %343 = vmatprep.subr.mxu0 0.0
    %344 = vmatpush1.msra.mxu0 %v294
    %345 = vmatprep.subr.mxu0 0.0
    %346 = vmatpush1.msra.mxu0 %v295
    %347 = vmatprep.subr.mxu0 0.0
    %348 = vmatpush1.msra.mxu0 %v296
    %349 = vmatprep.subr.mxu0 0.0
    %350 = vmatpush1.msra.mxu0 %v297
    %351 = vmatprep.subr.mxu0 0.0
    %352 = vmatpush1.msra.mxu0 %v298
    %353 = vmatprep.subr.mxu0 0.0
    %354 = vmatpush1.msra.mxu0 %v299
    %355 = vmatprep.subr.mxu0 0.0
    %356 = vmatpush1.msra.mxu0 %v300
    %357 = vmatprep.subr.mxu0 0.0
    %358 = vmatpush1.msra.mxu0 %v301
    %359 = vmatprep.subr.mxu0 0.0
    %360 = vmatpush1.msra.mxu0 %v302
    %361 = vmatprep.subr.mxu0 0.0
    %362 = vmatpush1.msra.mxu0 %v303
    %363 = vmatprep.subr.mxu0 0.0
    %364 = vmatpush1.msra.mxu0 %v304
    %365 = vmatprep.subr.mxu0 0.0
    %366 = vmatpush1.msra.mxu0 %v305
    %367 = vmatprep.subr.mxu0 0.0
    %368 = vmatpush1.msra.mxu0 %v306
    %369 = vmatprep.subr.mxu0 0.0
    %370 = vmatpush1.msra.mxu0 %v307
    %371 = vmatprep.subr.mxu0 0.0
    %372 = vmatpush1.msra.mxu0 %v308
    %373 = vmatprep.subr.mxu0 0.0
    %374 = vmatpush1.msra.mxu0 %v309
    %375 = vmatprep.subr.mxu0 0.0
    %376 = vmatpush1.msra.mxu0 %v310
    %377 = vmatprep.subr.mxu0 0.0
    %378 = vmatpush1.msra.mxu0 %v311
    %379 = vmatprep.subr.mxu0 0.0
    %380 = vmatpush1.msra.mxu0 %v312
    %381 = vmatprep.subr.mxu0 0.0
    %382 = vmatpush1.msra.mxu0 %v313
    %383 = vmatprep.subr.mxu0 0.0
    %384 = vmatpush1.msra.mxu0 %v314
    %385 = vmatprep.subr.mxu0 0.0
    %386 = vmatpush1.msra.mxu0 %v315
    %387 = vmatprep.mubr.f32.mxu0 %v283
    %388 = vmatmul.mubr.f32.gmra.mrb[0].mxu0 %v282
    %v389 = vpop.f32.mrb[0].mxu0
    %v390 = vadd.f32 %v321, %v389
    %v391 = vpop.f32.mrb[0].mxu0
    %392 = vdwg.mxu0
    %vm393 = vcmask 64512
    %394 = vst.msk [vmem:[#allocation5] sm:$0xff] %vm393, %v390
    // Predicated region
    $region34: #{net_forward.1} parent=1 // pred_check
      _
    $region35: #{net_forward.1} parent=1 // pred_check_branch
      %396 = sbr.rel (0) target = $region37
    $region36: #{net_forward.1} parent=1 // pred_region
      %s398 = ssub.s32 128, 128
      %399 = vsyncadd [#allocation4], %s398
      %s401 = sshll.u32 [#allocation5], 4
      %s402 = int_to_ptr.vmem [resolvable:$true] %s401
      %404 = dma.vmem_to_hbm [thread:$0]  %s402, 128, %s7, [#allocation4]
    $region37: #{net_forward.1} parent=1 // pred_fallthru
      _
    // Predicated region
    $region38: #{net_forward.1} parent=1 // pred_check
      _
    $region39: #{net_forward.1} parent=1 // pred_check_branch
      %406 = sbr.rel (0) target = $region41
    $region40: #{net_forward.1} parent=1 // pred_region
      %407 = dma.done [#allocation4], 128
    $region41: #{net_forward.1} parent=1 // pred_fallthru
      _
    %408 = vsyncpa [#allocation3], 1
    %409 = vsyncpa [#allocation4], 1

</llo_original>
